<compile_context>
chip_gen: v6e
topology: v6e:2x2x1
jax: 0.10.0
libtpu: 0.0.40
codegen_flags: <defaults>
</compile_context>

<pallas_src>
import jax
import jax.numpy as jnp
from jax.experimental import pallas as pl
from jax.experimental.pallas import tpu as pltpu


# ----------------------------- Pallas kernel --------------------------------

def _patch_encoder_kernel(p_ref, w_ref, pos_ref, cls_ref, o_ref):
    """One grid step handles a tile of TB batch elements.

    p_ref   : (TB, S, Kp)   bf16 patches for this batch tile
    w_ref   : (Kp, E)       bf16 conv weight, flattened + transposed (resident)
    pos_ref : (S, E)        f32 positional embedding with conv bias folded in
    cls_ref : (1, E)        f32 cls token (resident)
    o_ref   : (TB, 1+S, E)  output tile; row 0 of every batch element is cls
    """
    TB, S, _ = p_ref.shape
    cls_row = cls_ref[...].astype(o_ref.dtype)            # (1, E)

    def per_batch(i, carry):
        # Plain 2-D matmul on the MXU with f32 accumulation.  No (TB, S) ->
        # (TB*S) collapse: S need not be a multiple of 8, so that reshape
        # would force a sublane repack of the whole tile.
        y = jnp.dot(p_ref[i], w_ref[...], preferred_element_type=jnp.float32)
        y = y + pos_ref[...]                               # f32 add on the VPU
        # Fused cls row.  The offset store stays inside VMEM; the HBM DMA of
        # the whole (TB, 1+S, E) block remains aligned.
        o_ref[i, pl.ds(0, 1), :] = cls_row
        o_ref[i, pl.ds(1, S), :] = y.astype(o_ref.dtype)
        return carry

    jax.lax.fori_loop(0, TB, per_batch, 0)


# ------------------------- tiling / device heuristics ------------------------

def _round_up(x, m):
    return ((x + m - 1) // m) * m


def _vmem_capacity_bytes():
    try:
        cap = getattr(pltpu.get_tpu_info(), "vmem_capacity_bytes", None)
        if cap:
            return int(cap)
    except Exception:
        pass
    return 64 * 1024 * 1024          # most conservative (v7x per-TensorCore)


def _select_tiling(B, S, Kp, E, out_itemsize):
    """Pick (batch tile, scoped-VMEM limit) per TPU generation."""
    vmem_cap = _vmem_capacity_bytes()
    if vmem_cap >= 100 * 1024 * 1024:          # v5e / v6e: 128 MiB physical
        target_tb, vmem_limit, min_steps = 32, 96 * 1024 * 1024, 2
    else:                                       # v7x: 64 MiB per TensorCore
        target_tb, vmem_limit = 16, 48 * 1024 * 1024
        min_steps = 4 if B >= 8 else 2          # >= 2 grid steps per TensorCore

    tb = B if B <= 1 else max(1, min(target_tb, B // min_steps))

    def working_set(t):
        in_blk = t * S * Kp * 2                     # bf16 patch tile
        out_blk = t * (1 + S) * E * out_itemsize    # output tile
        resident = Kp * E * 2 + S * E * 4 + E * 4   # weight + pos + cls
        return 2 * (in_blk + out_blk + resident)    # double-buffered

    while tb > 1 and working_set(tb) > int(0.85 * vmem_limit):
        tb = max(1, tb // 2)
    return tb, vmem_limit


# ------------------------------- host wrapper --------------------------------

def vit_patch_encode(patches, weight_ke, pos_plus_bias, cls_token, *,
                     out_dtype=jnp.float32, block_b=None):
    """patches: (B, S, K); returns (B, 1+S, E) embeddings with the cls row fused."""
    B, S, K = patches.shape
    E = weight_ke.shape[1]

    # Pad only the contraction dim to a lane multiple (no-op for real ViT
    # dims, K = C*P*P = 768).  Zero padding is numerically exact.  The output
    # feature dim is NOT padded, so there is no padded writeback / slice pass.
    Kp = _round_up(K, 128)
    if Kp != K:
        patches = jnp.pad(patches, ((0, 0), (0, 0), (0, Kp - K)))
        weight_ke = jnp.pad(weight_ke, ((0, Kp - K), (0, 0)))

    patches = patches.astype(jnp.bfloat16)       # no-op if the caller cast already
    weight = weight_ke.astype(jnp.bfloat16)
    pos = pos_plus_bias.astype(jnp.float32)
    cls = cls_token.astype(jnp.float32).reshape(1, E)

    out_itemsize = jnp.dtype(out_dtype).itemsize
    if block_b is None:
        tb, vmem_limit = _select_tiling(B, S, Kp, E, out_itemsize)
    else:
        tb, vmem_limit = block_b, 64 * 1024 * 1024

    # Pad awkward batch sizes up to a tile multiple (padded rows are sliced
    # off below) instead of degrading to tiny TB=1 tiles.
    Bp = _round_up(B, tb)
    if Bp != B:
        patches = jnp.pad(patches, ((0, Bp - B), (0, 0), (0, 0)))

    out = pl.pallas_call(
        _patch_encoder_kernel,
        out_shape=jax.ShapeDtypeStruct((Bp, 1 + S, E), out_dtype),
        grid_spec=pltpu.PrefetchScalarGridSpec(
            num_scalar_prefetch=0,
            grid=(Bp // tb,),
            in_specs=[
                pl.BlockSpec((tb, S, Kp), lambda b: (b, 0, 0)),
                # Resident operands (constant index map).
                # TODO(synk): pipeline_mode=pl.Buffered(1) would drop their
                # duplicate buffers (~1.8 MB at ViT-B); left off for lowering
                # compatibility; the VMEM budget above already accounts for it.
                pl.BlockSpec((Kp, E), lambda b: (0, 0)),
                pl.BlockSpec((S, E), lambda b: (0, 0)),
                pl.BlockSpec((1, E), lambda b: (0, 0)),
            ],
            out_specs=pl.BlockSpec((tb, 1 + S, E), lambda b: (b, 0, 0)),
        ),
        compiler_params=pltpu.CompilerParams(
            dimension_semantics=("parallel",),
            vmem_limit_bytes=vmem_limit,
        ),
        cost_estimate=pl.CostEstimate(
            flops=2 * Bp * S * Kp * E,
            transcendentals=0,
            bytes_accessed=(Bp * S * Kp * 2 + Kp * E * 2 + S * E * 4 + E * 4
                            + Bp * (1 + S) * E * out_itemsize),
        ),
    )(patches, weight, pos, cls)

    return out[:B] if Bp != B else out


# ------------------------------- glue (JAX) ----------------------------------

def extract_patches(images, patch_size):
    """NCHW images -> (B, S, C*P*P) patches, flattened in (C, P, P) order."""
    B, C, H, W = images.shape
    P = patch_size
    Hf, Wf = H // P, W // P
    x = images.reshape(B, C, Hf, P, Wf, P)
    x = jnp.transpose(x, (0, 2, 4, 1, 3, 5))        # (B, Hf, Wf, C, P, P)
    return x.reshape(B, Hf * Wf, C * P * P)


def sinusoidal_positional_encoding(seq_len, dim):
    pos = jnp.arange(seq_len, dtype=jnp.float32)[:, None]
    i = jnp.arange(0, dim, 2, dtype=jnp.float32)[None, :]
    angle = pos / jnp.power(10000.0, i / dim)
    pe = jnp.zeros((seq_len, dim), jnp.float32)
    pe = pe.at[:, 0::2].set(jnp.sin(angle))
    pe = pe.at[:, 1::2].set(jnp.cos(angle[:, : dim // 2]))
    return pe


class VITPatchEncoderPallas:
    """Matches VITPatchEncoder.forward (sinusoidal positional embedding)."""

    def __init__(self, num_channels, image_size, patch_size, embedded_size,
                 key, out_dtype=jnp.float32):
        self.patch_size = patch_size
        self.embedded_size = embedded_size
        self.out_dtype = out_dtype
        Hf = image_size // patch_size
        Wf = image_size // patch_size
        self.sequence_length = Hf * Wf
        K = num_channels * patch_size * patch_size

        k_cls, k_w, k_b = jax.random.split(key, 3)
        # cls_token ~ randn(1, 1, E) -> stored as (1, E).
        self.cls_token = jax.random.normal(k_cls, (1, embedded_size), jnp.float32)
        # Conv2d(C, E, P, P) weight: (E, C, P, P) -> flatten (C, P, P) -> (K, E).
        bound = float(K) ** -0.5
        w_ecpp = jax.random.uniform(
            k_w, (embedded_size, num_channels, patch_size, patch_size),
            jnp.float32, -bound, bound)
        self.weight_ke = w_ecpp.reshape(embedded_size, K).T          # (K, E)
        bias = jax.random.uniform(k_b, (1, embedded_size), jnp.float32,
                                  -bound, bound)
        # Fold the conv bias into the positional embedding (one fewer input
        # and one fewer VPU add in the kernel).
        self.pos_plus_bias = sinusoidal_positional_encoding(
            self.sequence_length, embedded_size) + bias

    def __call__(self, images):
        # bf16 at the source: the convert fuses into the patchify transpose
        # and halves that pass's write bytes.
        patches = extract_patches(images.astype(jnp.bfloat16), self.patch_size)
        return vit_patch_encode(patches, self.weight_ke, self.pos_plus_bias,
                                self.cls_token, out_dtype=self.out_dtype)


# --------------------------------- main ---------------------------------------

if __name__ == "__main__":
    # Small config consistent with the module's forward semantics.
    B, C, H, W = 4, 3, 16, 16
    patch_size = 4
    embedded_size = 32

    key = jax.random.PRNGKey(0)
    k_img, k_params = jax.random.split(key)
    images = jax.random.normal(k_img, (B, C, H, W), jnp.float32)

    enc = VITPatchEncoderPallas(C, H, patch_size, embedded_size, k_params)
    fwd = jax.jit(enc.__call__)
    out = jax.block_until_ready(fwd(images))

    # Sanity: shape is (B, 1 + S, E).
    S = (H // patch_size) * (W // patch_size)
    assert out.shape == (B, 1 + S, embedded_size), out.shape

    # Pure-JAX reference with the same bf16-operand / f32-accumulate numerics.
    patches_ref = extract_patches(
        images.astype(jnp.bfloat16), patch_size).astype(jnp.float32)
    w_ref = enc.weight_ke.astype(jnp.bfloat16).astype(jnp.float32)
    body_ref = jnp.einsum("bsk,ke->bse", patches_ref, w_ref,
                          precision=jax.lax.Precision.HIGHEST) + enc.pos_plus_bias
    ref = jnp.concatenate(
        [jnp.broadcast_to(enc.cls_token[None], (B, 1, embedded_size)), body_ref],
        axis=1)
    err = float(jnp.max(jnp.abs(out.astype(jnp.float32) - ref)))
    assert err < 2e-3, err

    print("KERNEL_OK")
</pallas_src>

<mosaic_0001>
module attributes {stable_mosaic.version = 11 : i64} {
  func.func @_patch_encoder_kernel(%arg0: i32, %arg1: memref<2x16x128xbf16, #tpu.memory_space<vmem>>, %arg2: memref<128x32xbf16, #tpu.memory_space<vmem>>, %arg3: memref<16x32xf32, #tpu.memory_space<vmem>>, %arg4: memref<1x32xf32, #tpu.memory_space<vmem>>, %arg5: memref<2x17x32xf32, #tpu.memory_space<vmem>>) attributes {dimension_semantics = [#tpu.dimension_semantics<parallel>], iteration_bounds = array<i64: 2>, scalar_prefetch = 0 : i64, scratch_operands = 0 : i64, tpu.core_type = #tpu.core_type<tc>, window_params = [{transform_indices = @transform_0, window_bounds = array<i64: 2, 16, 128>}, {pipeline_mode = #tpu.pipeline_mode<synchronous>, transform_indices = @transform_1, window_bounds = array<i64: 128, 32>}, {pipeline_mode = #tpu.pipeline_mode<synchronous>, transform_indices = @transform_2, window_bounds = array<i64: 16, 32>}, {pipeline_mode = #tpu.pipeline_mode<synchronous>, transform_indices = @transform_3, window_bounds = array<i64: 1, 32>}, {transform_indices = @transform_4, window_bounds = array<i64: 2, 17, 32>}]} {
    %c0 = arith.constant 0 : index
    %c0_0 = arith.constant 0 : index
    %0 = vector.load %arg4[%c0, %c0_0] : memref<1x32xf32, #tpu.memory_space<vmem>>, vector<1x32xf32>
    %c0_i32 = arith.constant 0 : i32
    %c2_i32 = arith.constant 2 : i32
    %1 = arith.addi %c0_i32, %c2_i32 : i32
    %c1_i32 = arith.constant 1 : i32
    scf.for %arg6 = %c0_i32 to %1 step %c1_i32  : i32 {
      %2 = arith.index_cast %arg6 : i32 to index
      %c0_2 = arith.constant 0 : index
      %c0_3 = arith.constant 0 : index
      %3 = vector.load %arg1[%2, %c0_2, %c0_3] : memref<2x16x128xbf16, #tpu.memory_space<vmem>>, vector<1x16x128xbf16>
      %4 = vector.shape_cast %3 : vector<1x16x128xbf16> to vector<16x128xbf16>
      %c0_4 = arith.constant 0 : index
      %c0_5 = arith.constant 0 : index
      %5 = vector.load %arg2[%c0_4, %c0_5] : memref<128x32xbf16, #tpu.memory_space<vmem>>, vector<128x32xbf16>
      %cst = arith.constant dense<0.000000e+00> : vector<16x32xf32>
      %6 = tpu.matmul %4, %5, %cst {dimension_numbers = #tpu.dot_dimension_numbers<[1], [0], [0], [1], [0, 0, 1, 1], [], []>} : vector<16x128xbf16>, vector<128x32xbf16>, vector<16x32xf32> -> vector<16x32xf32>
      %c0_6 = arith.constant 0 : index
      %c0_7 = arith.constant 0 : index
      %7 = vector.load %arg3[%c0_6, %c0_7] : memref<16x32xf32, #tpu.memory_space<vmem>>, vector<16x32xf32>
      %8 = arith.addf %6, %7 : vector<16x32xf32>
      %9 = arith.index_cast %arg6 : i32 to index
      %c0_8 = arith.constant 0 : index
      %c0_9 = arith.constant 0 : index
      %10 = vector.load %arg5[%9, %c0_8, %c0_9] : memref<2x17x32xf32, #tpu.memory_space<vmem>>, vector<1x1x32xf32>
      %11 = vector.shape_cast %10 : vector<1x1x32xf32> to vector<1x32xf32>
      %12 = vector.shape_cast %0 : vector<1x32xf32> to vector<1x1x32xf32>
      tpu.vector_store %arg5[%9, %c0_8, %c0_9], %12 {strides = array<i32>} : memref<2x17x32xf32, #tpu.memory_space<vmem>>, vector<1x1x32xf32>,
      %13 = arith.index_cast %arg6 : i32 to index
      %c1 = arith.constant 1 : index
      %c0_10 = arith.constant 0 : index
      %14 = vector.load %arg5[%13, %c1, %c0_10] : memref<2x17x32xf32, #tpu.memory_space<vmem>>, vector<1x16x32xf32>
      %15 = vector.shape_cast %14 : vector<1x16x32xf32> to vector<16x32xf32>
      %16 = vector.shape_cast %8 : vector<16x32xf32> to vector<1x16x32xf32>
      tpu.vector_store %arg5[%13, %c1, %c0_10], %16 {strides = array<i32>} : memref<2x17x32xf32, #tpu.memory_space<vmem>>, vector<1x16x32xf32>,
    }
    %c2_i32_1 = arith.constant 2 : i32
    return
  }
  func.func @transform_0(%arg0: i32) -> (i32, i32, i32) {
    %c0_i32 = arith.constant 0 : i32
    %c0_i32_0 = arith.constant 0 : i32
    %c0_i32_1 = arith.constant 0 : i32
    return %arg0, %c0_i32, %c0_i32_0 : i32, i32, i32
  }
  func.func @transform_1(%arg0: i32) -> (i32, i32) {
    %c0_i32 = arith.constant 0 : i32
    %c0_i32_0 = arith.constant 0 : i32
    %c0_i32_1 = arith.constant 0 : i32
    return %c0_i32, %c0_i32_0 : i32, i32
  }
  func.func @transform_2(%arg0: i32) -> (i32, i32) {
    %c0_i32 = arith.constant 0 : i32
    %c0_i32_0 = arith.constant 0 : i32
    %c0_i32_1 = arith.constant 0 : i32
    return %c0_i32, %c0_i32_0 : i32, i32
  }
  func.func @transform_3(%arg0: i32) -> (i32, i32) {
    %c0_i32 = arith.constant 0 : i32
    %c0_i32_0 = arith.constant 0 : i32
    %c0_i32_1 = arith.constant 0 : i32
    return %c0_i32, %c0_i32_0 : i32, i32
  }
  func.func @transform_4(%arg0: i32) -> (i32, i32, i32) {
    %c0_i32 = arith.constant 0 : i32
    %c0_i32_0 = arith.constant 0 : i32
    %c0_i32_1 = arith.constant 0 : i32
    return %arg0, %c0_i32, %c0_i32_0 : i32, i32, i32
  }
}

</mosaic_0001>

<llo_original>
// kernel: a_call__.1
$region0: #{a_call__.1}
  #allocation0 [shape = 'u32[]', space=smem, size = 0x4, offset = 0x4, fixed_abs, tag = 'smem constant byte address 0x4 - core index']
  #allocation1 [shape = 'u32[144,128]{1,0:T(1,128)}', space=vmem, size = 0x12000, scoped, tag = 'internal scratch']
  %s0 = inlined_call_operand.vmem [shape: bf16[4,16,128], index: 0, kind: input, shape index: {}]
  %s1 = inlined_call_operand.vmem [shape: bf16[128,32], index: 1, kind: input, shape index: {}]
  %s2 = inlined_call_operand.vmem [shape: f32[16,32], index: 2, kind: input, shape index: {}]
  %s3 = inlined_call_operand.vmem [shape: f32[1,32], index: 3, kind: input, shape index: {}]
  %s4 = inlined_call_operand.vmem [shape: f32[4,17,32], index: 4, kind: output, shape index: {}]
  %s5 = sld [smem:[#allocation0]]
  $region56: #{a_call__.1} parent=0
    _
  %s7 = ssub.s32 1, %s5
  %s8 = scalar_select 0, %s7, %s5
  loop: start=0, step=1, limit=4
  $region2: #{a_call__.1} parent=0 // loop_pre_header
    _
  $region3: #{a_call__.1} parent=0 // loop_header
    %s10 = sphi 0, %s14
    %p11 = scmp.ge.s32.totalorder %s10, 4
    %s20 = sphi 0, %s22
    %s23 = sphi 0, %s20
    %s24 = sphi 0, %s23
    %s40 = sphi 0, %s24
    %s44 = sphi 0, %s44
    %s46 = sphi 0, %s44
    %s47 = sphi 0, %s46
    %s61 = sphi 0, %s47
    %s65 = sphi 0, %s65
    %s67 = sphi 0, %s65
    %s68 = sphi 0, %s67
    %s82 = sphi 0, %s68
    %s86 = sphi 0, %s86
    %s88 = sphi 0, %s86
    %s89 = sphi 0, %s88
    %s103 = sphi 0, %s89
    %s109 = sphi 0, %s111
    %s112 = sphi 0, %s109
    %s113 = sphi 0, %s112
    %s129 = sphi 0, %s113
  $region4: #{a_call__.1} parent=0 // loop_header_branch
    %13 = sbr.rel (%p11) target = $region8
  $region5: #{a_call__.1} parent=0 // loop_body
    %s15 = ssub.s32 %s10, 1
    %s16 = ssub.s32 %s10, 2
    %s17 = sadd.s32 %s10, 1
    %s18 = ssub.s32 %s10, %s17
    %p19 = scmp.eq.s32.totalorder %s18, 0
    %s21 = sadd.s32 %s20, 1
    %s22 = scalar_select %p19, %s20, %s21
    %p25 = pneg %p19
    %p26 = scmp.eq.s32.totalorder %s10, 1
    %p27 = por %p25, %p26
    %p28 = scmp.ne.s32.totalorder %s20, %s23
    %p29 = scmp.eq.s32.totalorder %s10, 0
    %p30 = por %p28, %p29
    %p31 = scmp.ne.s32.totalorder %s20, %s23
    %p32 = scmp.eq.s32.totalorder %s15, 1
    %p33 = por %p31, %p32
    %p34 = scmp.ne.s32.totalorder %s23, %s24
    %p35 = scmp.eq.s32.totalorder %s15, 0
    %p36 = por %p34, %p35
    %p37 = scmp.ne.s32.totalorder %s23, %s24
    %p38 = scmp.eq.s32.totalorder %s16, 1
    %p39 = por %p37, %p38
    %p41 = scmp.ne.s32.totalorder %s24, %s40
    %p42 = scmp.eq.s32.totalorder %s16, 0
    %p43 = por %p41, %p42
    %s45 = sadd.s32 %s44, 1
    %p48 = scmp.eq.s32.totalorder %s10, 1
    %p49 = scmp.ne.s32.totalorder %s44, %s46
    %p50 = scmp.eq.s32.totalorder %s10, 0
    %p51 = por %p49, %p50
    %p52 = scmp.ne.s32.totalorder %s44, %s46
    %p53 = scmp.eq.s32.totalorder %s15, 1
    %p54 = por %p52, %p53
    %p55 = scmp.ne.s32.totalorder %s46, %s47
    %p56 = scmp.eq.s32.totalorder %s15, 0
    %p57 = por %p55, %p56
    %p58 = scmp.ne.s32.totalorder %s46, %s47
    %p59 = scmp.eq.s32.totalorder %s16, 1
    %p60 = por %p58, %p59
    %p62 = scmp.ne.s32.totalorder %s47, %s61
    %p63 = scmp.eq.s32.totalorder %s16, 0
    %p64 = por %p62, %p63
    %s66 = sadd.s32 %s65, 1
    %p69 = scmp.eq.s32.totalorder %s10, 1
    %p70 = scmp.ne.s32.totalorder %s65, %s67
    %p71 = scmp.eq.s32.totalorder %s10, 0
    %p72 = por %p70, %p71
    %p73 = scmp.ne.s32.totalorder %s65, %s67
    %p74 = scmp.eq.s32.totalorder %s15, 1
    %p75 = por %p73, %p74
    %p76 = scmp.ne.s32.totalorder %s67, %s68
    %p77 = scmp.eq.s32.totalorder %s15, 0
    %p78 = por %p76, %p77
    %p79 = scmp.ne.s32.totalorder %s67, %s68
    %p80 = scmp.eq.s32.totalorder %s16, 1
    %p81 = por %p79, %p80
    %p83 = scmp.ne.s32.totalorder %s68, %s82
    %p84 = scmp.eq.s32.totalorder %s16, 0
    %p85 = por %p83, %p84
    %s87 = sadd.s32 %s86, 1
    %p90 = scmp.eq.s32.totalorder %s10, 1
    %p91 = scmp.ne.s32.totalorder %s86, %s88
    %p92 = scmp.eq.s32.totalorder %s10, 0
    %p93 = por %p91, %p92
    %p94 = scmp.ne.s32.totalorder %s86, %s88
    %p95 = scmp.eq.s32.totalorder %s15, 1
    %p96 = por %p94, %p95
    %p97 = scmp.ne.s32.totalorder %s88, %s89
    %p98 = scmp.eq.s32.totalorder %s15, 0
    %p99 = por %p97, %p98
    %p100 = scmp.ne.s32.totalorder %s88, %s89
    %p101 = scmp.eq.s32.totalorder %s16, 1
    %p102 = por %p100, %p101
    %p104 = scmp.ne.s32.totalorder %s89, %s103
    %p105 = scmp.eq.s32.totalorder %s16, 0
    %p106 = por %p104, %p105
    %s107 = ssub.s32 %s10, %s17
    %p108 = scmp.eq.s32.totalorder %s107, 0
    %s110 = sadd.s32 %s109, 1
    %s111 = scalar_select %p108, %s109, %s110
    %p114 = pneg %p108
    %p115 = scmp.eq.s32.totalorder %s10, 1
    %p116 = por %p114, %p115
    %p117 = scmp.ne.s32.totalorder %s109, %s112
    %p118 = scmp.eq.s32.totalorder %s10, 0
    %p119 = por %p117, %p118
    %p120 = scmp.ne.s32.totalorder %s109, %s112
    %p121 = scmp.eq.s32.totalorder %s15, 1
    %p122 = por %p120, %p121
    %p123 = scmp.ne.s32.totalorder %s112, %s113
    %p124 = scmp.eq.s32.totalorder %s15, 0
    %p125 = por %p123, %p124
    %p126 = scmp.ne.s32.totalorder %s112, %s113
    %p127 = scmp.eq.s32.totalorder %s16, 1
    %p128 = por %p126, %p127
    %p130 = scmp.ne.s32.totalorder %s113, %s129
    %p131 = scmp.eq.s32.totalorder %s16, 0
    %p132 = por %p130, %p131
    %p133 = scmp.le.s32.totalorder 1, %s10
    %p134 = scmp.lt.s32.totalorder %s10, 3
    %p135 = pnand %p133, %p134
    %p136 = pneg %p135
    // Predicated region
    $region9: #{a_call__.1} parent=5 // pred_check
      _
    $region10: #{a_call__.1} parent=5 // pred_check_branch
      %138 = sbr.rel (%p135) target = $region12
    $region11: #{a_call__.1} parent=5 // pred_region
      %s139 = ssub.s32 %s10, 1
      // Predicated region
      $region13: #{a_call__.1} parent=11 // pred_check
        %p140 = pneg %p57
      $region14: #{a_call__.1} parent=11 // pred_check_branch
        %142 = sbr.rel (%p140) target = $region16
      $region15: #{a_call__.1} parent=11 // pred_region
        _
      $region16: #{a_call__.1} parent=11 // pred_fallthru
        _
      // Predicated region
      $region17: #{a_call__.1} parent=11 // pred_check
        %p143 = pneg %p78
      $region18: #{a_call__.1} parent=11 // pred_check_branch
        %145 = sbr.rel (%p143) target = $region20
      $region19: #{a_call__.1} parent=11 // pred_region
        _
      $region20: #{a_call__.1} parent=11 // pred_fallthru
        _
      // Predicated region
      $region21: #{a_call__.1} parent=11 // pred_check
        %p146 = pneg %p99
      $region22: #{a_call__.1} parent=11 // pred_check_branch
        %148 = sbr.rel (%p146) target = $region24
      $region23: #{a_call__.1} parent=11 // pred_region
        _
      $region24: #{a_call__.1} parent=11 // pred_fallthru
        _
    $region12: #{a_call__.1} parent=5 // pred_fallthru
      _
    %p149 = scmp.lt.s32.totalorder %s10, 2
    // Predicated region
    $region25: #{a_call__.1} parent=5 // pred_check
      %p150 = pneg %p149
    $region26: #{a_call__.1} parent=5 // pred_check_branch
      %152 = sbr.rel (%p150) target = $region28
    $region27: #{a_call__.1} parent=5 // pred_region
      // Predicated region
      $region29: #{a_call__.1} parent=27 // pred_check
        %p153 = pneg %p30
      $region30: #{a_call__.1} parent=27 // pred_check_branch
        %155 = sbr.rel (%p153) target = $region32
      $region31: #{a_call__.1} parent=27 // pred_region
        %s156 = smul.u32 2, %s10
        %p157 = scmp.lt.s32.totalorder %s156, 3
        %s158 = scalar_select %p157, %s156, 3
        %s159 = smul.addr %s158, 2
        %s160 = smul.addr %s159, 4
        %s161 = scalar_lea.vmem %s0, %s160
        %s162 = smul.u32 2, %s10
      $region32: #{a_call__.1} parent=27 // pred_fallthru
        _
    $region28: #{a_call__.1} parent=5 // pred_fallthru
      _
    %p163 = scmp.le.s32.totalorder 1, %s10
    %p164 = scmp.lt.s32.totalorder %s10, 3
    %p165 = pnand %p163, %p164
    %p166 = pneg %p165
    // Predicated region
    $region33: #{a_call__.1} parent=5 // pred_check
      _
    $region34: #{a_call__.1} parent=5 // pred_check_branch
      %168 = sbr.rel (%p165) target = $region36
    $region35: #{a_call__.1} parent=5 // pred_region
      %s169 = ssub.s32 %s10, 1
      %s170 = smul.u32 2, %s15
      %p171 = scmp.lt.s32.totalorder %s170, 3
      %s172 = scalar_select %p171, %s170, 3
      %s173 = smul.addr %s172, 2
      %s174 = smul.addr %s173, 4
      %s175 = scalar_lea.vmem %s0, %s174
      %p176 = pneg %p36
      %p177 = pneg %p33
      %p178 = pneg %p57
      %p179 = pneg %p54
      %p180 = pneg %p78
      %p181 = pneg %p75
      %p182 = pneg %p99
      %p183 = pneg %p96
      %p184 = pneg %p125
      %p185 = pneg %p122
      %s186 = smul.u32 2, %s15
      %p187 = scmp.lt.s32.totalorder %s186, 3
      %s188 = scalar_select %p187, %s186, 3
      %s189 = smul.addr %s188, 3
      %s190 = smul.addr %s189, 8
      %s191 = scalar_lea.vmem %s4, %s190
      %s192 = smul.u32 2, %s15
      %p193 = scmp.lt.s32.totalorder %s192, 3
      %s194 = scalar_select %p193, %s192, 3
      %s195 = smul.addr %s194, 2
      %s196 = smul.addr %s195, 4
      %s197 = scalar_lea.vmem %s0, %s196
      %s198 = smul.u32 2, %s15
      %s199 = smul.u32 2, %s15
      %p200 = scmp.lt.s32.totalorder %s199, 3
      %s201 = scalar_select %p200, %s199, 3
      %s202 = smul.addr %s201, 3
      %s203 = smul.addr %s202, 8
      %s204 = scalar_lea.vmem %s4, %s203
      %s205 = smul.u32 2, %s15
      %v207 = vld [vmem:[%s3] sm:$0x1]
      loop: start=0, step=1, limit=2
      $region37: #{a_call__.1} parent=35 // loop_pre_header
        _
      $region38: #{a_call__.1} parent=35 // loop_header
        %s209 = sphi 0, %s213
        %p210 = scmp.ge.s32.totalorder %s209, 2
      $region39: #{a_call__.1} parent=35 // loop_header_branch
        %212 = sbr.rel (%p210) target = $region43
      $region40: #{a_call__.1} parent=35 // loop_body
        %s214 = smul.u32 %s209, 2
        %s215 = smul.addr %s214, 4
        %s216 = scalar_lea.vmem %s197, %s215
        %v217 = vld [vmem:[%s216] sm:$0xf]
        %v218 = vld [vmem:[%s216 + $0x4] sm:$0xf]
        %v219 = vld [vmem:[%s1] sm:$0xf]
        %v220 = vld [vmem:[%s1 + $0x4] sm:$0xf]
        %v221 = vld [vmem:[%s1 + $0x8] sm:$0xf]
        %v222 = vld [vmem:[%s1 + $0xc] sm:$0xf]
        %v223 = vld [vmem:[%s1 + $0x10] sm:$0xf]
        %v224 = vld [vmem:[%s1 + $0x14] sm:$0xf]
        %v225 = vld [vmem:[%s1 + $0x18] sm:$0xf]
        %v226 = vld [vmem:[%s1 + $0x1c] sm:$0xf]
        %v227 = vld [vmem:[%s1 + $0x20] sm:$0xf]
        %v228 = vld [vmem:[%s1 + $0x24] sm:$0xf]
        %v229 = vld [vmem:[%s1 + $0x28] sm:$0xf]
        %v230 = vld [vmem:[%s1 + $0x2c] sm:$0xf]
        %v231 = vld [vmem:[%s1 + $0x30] sm:$0xf]
        %v232 = vld [vmem:[%s1 + $0x34] sm:$0xf]
        %v233 = vld [vmem:[%s1 + $0x38] sm:$0xf]
        %v234 = vld [vmem:[%s1 + $0x3c] sm:$0xf]
        %v235 = vld [vmem:[%s2] sm:$0xff]
        %v236 = vld [vmem:[%s2 + $0x8] sm:$0xff]
        %v239 = vunpack.c.l.b16 %v217
        %v240 = vunpack.c.l.b16 %v218
        %v241 = vpack.c.b16 %v240, %v239
        %v259 = vunpack.c.l.b16 %v219
        %v260 = vunpack.c.l.b16 %v220
        %v261 = vunpack.c.l.b16 %v221
        %v262 = vunpack.c.l.b16 %v222
        %v263 = vunpack.c.l.b16 %v223
        %v264 = vunpack.c.l.b16 %v224
        %v265 = vunpack.c.l.b16 %v225
        %v266 = vunpack.c.l.b16 %v226
        %v267 = vunpack.c.l.b16 %v227
        %v268 = vunpack.c.l.b16 %v228
        %v269 = vunpack.c.l.b16 %v229
        %v270 = vunpack.c.l.b16 %v230
        %v271 = vunpack.c.l.b16 %v231
        %v272 = vunpack.c.l.b16 %v232
        %v273 = vunpack.c.l.b16 %v233
        %v274 = vunpack.c.l.b16 %v234
        %v275 = vpack.c.b16 %v260, %v259
        %v276 = vpack.c.b16 %v262, %v261
        %v277 = vpack.c.b16 %v264, %v263
        %v278 = vpack.c.b16 %v266, %v265
        %v279 = vpack.c.b16 %v268, %v267
        %v280 = vpack.c.b16 %v270, %v269
        %v281 = vpack.c.b16 %v272, %v271
        %v282 = vpack.c.b16 %v274, %v273
        %291 = vmatprep.subr.bf16.mxu0 0
        %292 = vmatpush1.bf16.msra.mxu0 %v282
        %293 = vmatprep.subr.bf16.mxu0 0
        %294 = vmatpush1.bf16.msra.mxu0 %v281
        %295 = vmatprep.subr.bf16.mxu0 0
        %296 = vmatpush1.bf16.msra.mxu0 %v280
        %297 = vmatprep.subr.bf16.mxu0 0
        %298 = vmatpush1.bf16.msra.mxu0 %v279
        %299 = vmatprep.subr.bf16.mxu0 0
        %300 = vmatpush1.bf16.msra.mxu0 %v278
        %301 = vmatprep.subr.bf16.mxu0 0
        %302 = vmatpush1.bf16.msra.mxu0 %v277
        %303 = vmatprep.subr.bf16.mxu0 0
        %304 = vmatpush1.bf16.msra.mxu0 %v276
        %305 = vmatprep.subr.bf16.mxu0 0
        %306 = vmatpush1.bf16.msra.mxu0 %v275
        %307 = vmatprep.subr.bf16.mxu0 0
        %308 = vmatpush2.bf16.msra.mxu0 0
        %309 = vmatprep.subr.bf16.mxu0 0
        %310 = vmatpush2.bf16.msra.mxu0 0
        %311 = vmatprep.subr.bf16.mxu0 0
        %312 = vmatpush2.bf16.msra.mxu0 0
        %313 = vmatprep.subr.bf16.mxu0 0
        %314 = vmatpush2.bf16.msra.mxu0 0
        %315 = vmatprep.subr.bf16.mxu0 0
        %316 = vmatpush2.bf16.msra.mxu0 0
        %317 = vmatprep.subr.bf16.mxu0 0
        %318 = vmatpush2.bf16.msra.mxu0 0
        %319 = vmatprep.subr.bf16.mxu0 0
        %320 = vmatpush2.bf16.msra.mxu0 0
        %321 = vmatprep.subr.bf16.mxu0 0
        %322 = vmatpush2.bf16.msra.mxu0 0
        %323 = vmatprep.mubr.bf16.mxu0 0
        %324 = vmatmul.mubr.bf16.gmra.mxu0 %v241
        %v325 = vpop.f32.mrf.mxu0
        %v326 = vadd.f32 %v235, %v325
        %v327 = vpop.f32.mrf.mxu0
        %v328 = vpop.f32.mrf.mxu0
        %v329 = vadd.f32 %v236, %v328
        %v330 = vpop.f32.mrf.mxu0
        %331 = vdwg.mxu0
        %s332 = smul.u32 %s209, 24
        %s333 = scalar_lea.vmem %s204, %s332
        %vm334 = vcmask 253952
        %335 = vst.msk [vmem:[%s333] sm:$0x1] %vm334, %v207
        %vm336 = vcmask 261120
        %337 = vst.msk [vmem:[%s333 + $0x1] sm:$0xff] %vm336, %v326
        %338 = vst.msk [vmem:[%s333 + $0x9] sm:$0xff] %vm336, %v329
      $region41: #{a_call__.1} parent=35 // loop_footer
        %s213 = sadd.s32 1, %s209
      $region42: #{a_call__.1} parent=35 // loop_footer_branch
        %208 = sbr.rel target = $region38
      $region43: #{a_call__.1} parent=35 // loop_exit
        _
      %s339 = smul.u32 2, %s15
      %p340 = scmp.lt.s32.totalorder %s339, 3
      %s341 = scalar_select %p340, %s339, 3
      %s342 = smul.addr %s341, 3
      %s343 = smul.addr %s342, 8
      %s344 = scalar_lea.vmem %s4, %s343
      // Predicated region
      $region44: #{a_call__.1} parent=35 // pred_check
        %p345 = pneg %p122
      $region45: #{a_call__.1} parent=35 // pred_check_branch
        %347 = sbr.rel (%p345) target = $region47
      $region46: #{a_call__.1} parent=35 // pred_region
        %s348 = smul.u32 2, %s15
      $region47: #{a_call__.1} parent=35 // pred_fallthru
        _
    $region36: #{a_call__.1} parent=5 // pred_fallthru
      _
    %p349 = scmp.le.s32.totalorder 2, %s10
    // Predicated region
    $region48: #{a_call__.1} parent=5 // pred_check
      %p350 = pneg %p349
    $region49: #{a_call__.1} parent=5 // pred_check_branch
      %352 = sbr.rel (%p350) target = $region51
    $region50: #{a_call__.1} parent=5 // pred_region
      %s353 = ssub.s32 %s10, 2
      // Predicated region
      $region52: #{a_call__.1} parent=50 // pred_check
        %p354 = pneg %p128
      $region53: #{a_call__.1} parent=50 // pred_check_branch
        %356 = sbr.rel (%p354) target = $region55
      $region54: #{a_call__.1} parent=50 // pred_region
        %s357 = smul.u32 2, %s16
        %p358 = scmp.lt.s32.totalorder %s357, 3
        %s359 = scalar_select %p358, %s357, 3
        %s360 = smul.addr %s359, 3
        %s361 = smul.addr %s360, 8
        %s362 = scalar_lea.vmem %s4, %s361
      $region55: #{a_call__.1} parent=50 // pred_fallthru
        _
    $region51: #{a_call__.1} parent=5 // pred_fallthru
      _
  $region6: #{a_call__.1} parent=0 // loop_footer
    %s14 = sadd.s32 1, %s10
  $region7: #{a_call__.1} parent=0 // loop_footer_branch
    %9 = sbr.rel target = $region3
  $region8: #{a_call__.1} parent=0 // loop_exit
    _

</llo_original>
